<compile_context>
chip_gen: v5e
topology: v5e:2x2
jax: 0.10.0
libtpu: 0.0.40
codegen_flags: <defaults>
</compile_context>

<pallas_src>
import math

import jax
import jax.numpy as jnp
from jax.experimental import pallas as pl
from jax.experimental.pallas import tpu as pltpu


# ---------------------------------------------------------------------------
# Path 1 (recommended): no kernel at all — the passthrough is free.
# ---------------------------------------------------------------------------
def linear_postprocessor_forward(samples: jax.Array, targets: jax.Array):
    return {"preds": samples, "target": targets}


# ---------------------------------------------------------------------------
# Path 2: Pallas zero-copy anchor via input/output aliasing (+ donation).
# ---------------------------------------------------------------------------
def _alias_anchor_kernel(samples_hbm_ref, preds_hbm_ref, flag_ref):
    # preds aliases samples (input_output_aliases={0: 0}); no data movement is
    # needed. The SMEM flag write keeps the body non-empty at ~zero cost.
    del samples_hbm_ref, preds_hbm_ref
    flag_ref[0] = jnp.int32(1)


def linear_postprocessor_forward_pallas(samples: jax.Array, targets: jax.Array):
    preds = pl.pallas_call(
        _alias_anchor_kernel,
        out_shape=jax.ShapeDtypeStruct(samples.shape, samples.dtype),
        in_specs=[pl.BlockSpec(memory_space=pl.ANY)],   # stay in HBM, no auto-DMA
        out_specs=pl.BlockSpec(memory_space=pl.ANY),
        scratch_shapes=[pltpu.SMEM((1,), jnp.int32)],
        input_output_aliases={0: 0},                    # bytes moved == 0 when donated
    )(samples)
    # targets passthrough stays outside the kernel.
    return {"preds": preds, "target": targets}


# Zero-copy requires donating `samples`; this wrapper makes the alias honest.
linear_postprocessor_forward_pallas_donated = jax.jit(
    linear_postprocessor_forward_pallas, donate_argnums=(0,))


# ---------------------------------------------------------------------------
# Path 3: materialized copy via direct HBM->HBM DMA (no VMEM staging).
# ---------------------------------------------------------------------------
_CHUNK_BYTES = 16 * 1024 * 1024  # ~16 MiB per DMA: a handful of large DMAs


def _sublane_pack(dtype) -> int:
    # 8 sublanes of 32-bit; sub-32-bit dtypes pack 2x/4x along sublanes.
    bits = jnp.dtype(dtype).itemsize * 8
    return 8 * max(1, 32 // bits)


def _make_hbm_copy_kernel(rows: int, chunk_rows: int):
    n_full = rows // chunk_rows
    tail = rows - n_full * chunk_rows

    def kernel(x_hbm, o_hbm, sem):
        def chunk(start, nrows, slot):
            return pltpu.make_async_copy(
                x_hbm.at[pl.ds(start, nrows)],
                o_hbm.at[pl.ds(start, nrows)],
                sem.at[slot])

        if n_full > 0:
            @pl.loop(0, n_full)
            def _(i):
                slot = i & 1
                # Reuse a semaphore slot only after its previous DMA drained
                # (two chunk DMAs in flight at any time; regions are disjoint).
                @pl.when(i >= 2)
                def _():
                    chunk(0, chunk_rows, slot).wait()
                chunk(i * chunk_rows, chunk_rows, slot).start()

            # Drain the (up to two) still in-flight chunk DMAs.
            if n_full >= 2:
                chunk(0, chunk_rows, (n_full - 2) & 1).wait()
            chunk(0, chunk_rows, (n_full - 1) & 1).wait()

        if tail > 0:
            t = chunk(n_full * chunk_rows, tail, 0)
            t.start()
            t.wait()

    return kernel


def linear_postprocessor_forward_pallas_copy(samples: jax.Array, targets: jax.Array):
    if samples.size == 0:
        return {"preds": samples, "target": targets}

    # Chunk along the leading dim; 0-d inputs become a single-row array.
    x = samples if samples.ndim >= 1 else samples.reshape(1)
    rows = x.shape[0]
    row_bytes = math.prod(x.shape[1:]) * x.dtype.itemsize

    chunk_rows = min(rows, max(1, _CHUNK_BYTES // max(1, row_bytes)))
    pack = _sublane_pack(x.dtype)
    if chunk_rows < rows and chunk_rows >= pack:
        chunk_rows = (chunk_rows // pack) * pack  # dtype-aware sublane alignment

    nbytes = x.size * x.dtype.itemsize
    preds = pl.pallas_call(
        _make_hbm_copy_kernel(rows, chunk_rows),
        out_shape=jax.ShapeDtypeStruct(x.shape, x.dtype),
        in_specs=[pl.BlockSpec(memory_space=pl.ANY)],
        out_specs=pl.BlockSpec(memory_space=pl.ANY),
        scratch_shapes=[pltpu.SemaphoreType.DMA((2,))],
        cost_estimate=pl.CostEstimate(
            flops=0, transcendentals=0, bytes_accessed=2 * nbytes),
    )(x)
    return {"preds": preds.reshape(samples.shape), "target": targets}


if __name__ == "__main__":
    key = jax.random.PRNGKey(0)
    k_samples, k_targets = jax.random.split(key)

    # Small shapes consistent with a linear-probe postprocessor:
    # samples = classifier logits [batch=8, num_classes=32], targets = [batch].
    samples = jax.random.normal(k_samples, (8, 32), dtype=jnp.float32)
    targets = jax.random.randint(k_targets, (8,), 0, 32, dtype=jnp.int32)
    jax.block_until_ready((samples, targets))

    # Path 1: recommended zero-cost passthrough.
    out_direct = linear_postprocessor_forward(samples, targets)

    # Path 2: alias anchor with DONATION. Donate a private copy of samples so
    # the alias is genuinely zero-copy while the original `samples` stays
    # valid for the correctness checks below.
    samples_donatable = jnp.copy(samples)
    jax.block_until_ready(samples_donatable)
    out_alias = linear_postprocessor_forward_pallas_donated(samples_donatable, targets)
    jax.block_until_ready(out_alias)

    # Path 3: fresh preds buffer via direct HBM->HBM DMA.
    out_copy = jax.jit(linear_postprocessor_forward_pallas_copy)(samples, targets)
    jax.block_until_ready(out_copy)

    for out in (out_direct, out_alias, out_copy):
        assert out["preds"].shape == samples.shape and out["preds"].dtype == samples.dtype
        assert out["target"].shape == targets.shape and out["target"].dtype == targets.dtype
        assert bool(jnp.all(out["preds"] == samples))
        assert bool(jnp.all(out["target"] == targets))

    print("KERNEL_OK")
</pallas_src>

<mosaic_0001>
module attributes {stable_mosaic.version = 11 : i64} {
  func.func @_alias_anchor_kernel(%arg0: memref<8x32xf32, #tpu.memory_space<any>>, %arg1: memref<8x32xf32, #tpu.memory_space<any>>, %arg2: memref<1xi32, #tpu.memory_space<smem>>) attributes {dimension_semantics = [], scalar_prefetch = 0 : i64, scratch_operands = 1 : i64, tpu.core_type = #tpu.core_type<tc>} {
    %c1_i32 = arith.constant 1 : i32
    %c0 = arith.constant 0 : index
    %0 = memref.load %arg2[%c0] : memref<1xi32, #tpu.memory_space<smem>>
    memref.store %c1_i32, %arg2[%c0] : memref<1xi32, #tpu.memory_space<smem>>
    return
  }
}

</mosaic_0001>

<llo_original>
// kernel: linear_postprocessor_forward_pallas.1
$region0: #{linear_postprocessor_forward_pallas.1}
  #allocation0 [shape = 'u32[]', space=smem, size = 0x4, offset = 0x4, fixed_abs, tag = 'smem constant byte address 0x4 - core index']
  #allocation1 [shape = 'u32[72,128]{1,0:T(1,128)}', space=vmem, size = 0x9000, scoped, tag = 'internal scratch']
  #allocation2 [shape = 's32[1]{0:T(128)}', space=smem, size = 0x200, scoped, tag = 'scratch operand']
  %s0 = inlined_call_operand.hbm [shape: f32[8,32], index: 0, kind: input, shape index: {}, may-alias: {0,1}]
  %s1 = inlined_call_operand.hbm [shape: f32[8,32], index: 1, kind: output, shape index: {}, may-alias: {0,1}]
  %s2 = sld [smem:[#allocation0]]
  $region2: #{linear_postprocessor_forward_pallas.1} parent=0
    _
  %s4 = ssub.s32 1, %s2
  %s5 = scalar_select 0, %s4, %s2
  %s6 = scalar_lea.smem [#allocation2], 0
  %7 = sst [smem:[%s6]] 1

</llo_original>
